<compile_context>
chip_gen: v6e
topology: v6e:2x2x1
jax: 0.10.0
libtpu: 0.0.40
codegen_flags: <defaults>
</compile_context>

<pallas_src>
import jax
import jax.numpy as jnp
from jax.experimental import pallas as pl
from jax.experimental.pallas import tpu as pltpu

_LANE = 128
_MIB = 1024 * 1024


def _round_up(v, m):
    return (v + m - 1) // m * m


def _cdiv(a, b):
    return (a + b - 1) // b


def _ffn_kernel(x_ref, w1_ref, b1_ref, w2_ref, b2_ref, o_ref, acc_ref):
    """One (row-tile, hidden-tile) step of the fused FFN."""
    j = pl.program_id(1)

    @pl.when(j == 0)
    def _():
        acc_ref[...] = jnp.zeros_like(acc_ref)

    # First linear for this hidden chunk (+bias, ReLU) in f32.
    h = jnp.dot(x_ref[...], w1_ref[...], preferred_element_type=jnp.float32)
    h = jnp.maximum(h + b1_ref[...], 0.0)
    # Partial contribution of this hidden chunk to the output, accumulated f32.
    acc_ref[...] += jnp.dot(h.astype(w2_ref.dtype), w2_ref[...],
                            preferred_element_type=jnp.float32)

    @pl.when(j == pl.num_programs(1) - 1)
    def _():
        # TODO(synk): Dropout is identity in eval mode; training-mode masking
        # (pltpu.prng_seed / prng_random_bits) intentionally omitted.
        o_ref[...] = (acc_ref[...] + b2_ref[...]).astype(o_ref.dtype)


def _phys_vmem_bytes():
    try:
        return pltpu.get_tpu_info().vmem_capacity_bytes
    except Exception:
        return 64 * _MIB  # conservative: v7x per-TensorCore VMEM


def prepare_ffn_params(w1, b1, w2, b2, mxu_dtype=jnp.bfloat16):
    """Pad (to lane multiples) and cast parameters ONCE, outside the hot path.

    Args:
      w1, w2: (n_dim, n_dim) weights laid out as (in, out).
      b1, b2: (n_dim,) biases.
      mxu_dtype: dtype fed to the MXU (bf16 recommended); None keeps original.
    Returns:
      (w1p, b1p, w2p, b2p) padded to n_pad = round_up(n_dim, 128); biases are
      f32 row vectors of shape (1, n_pad).
    """
    n_dim = w1.shape[0]
    n_pad = _round_up(n_dim, _LANE)
    dn = n_pad - n_dim
    if dn:
        w1 = jnp.pad(w1, ((0, dn), (0, dn)))
        w2 = jnp.pad(w2, ((0, dn), (0, dn)))
        b1 = jnp.pad(b1, ((0, dn),))
        b2 = jnp.pad(b2, ((0, dn),))
    wdt = w1.dtype if mxu_dtype is None else mxu_dtype
    return (w1.astype(wdt), b1.astype(jnp.float32).reshape(1, n_pad),
            w2.astype(wdt), b2.astype(jnp.float32).reshape(1, n_pad))


@jax.jit
def classic_ffn_block(x, w1p, b1p, w2p, b2p):
    """Applies the classic FFN block.

    Args:
      x: (*, n_dim) input.
      w1p, b1p, w2p, b2p: outputs of prepare_ffn_params.
    Returns:
      Output with the same shape/dtype as x.
    """
    orig_shape = x.shape
    orig_dtype = x.dtype
    n_dim = orig_shape[-1]
    n_pad = w1p.shape[0]

    x2d = x.reshape(-1, n_dim)
    rows = x2d.shape[0]

    mxu_dtype = w1p.dtype
    xin_bytes = jnp.dtype(mxu_dtype).itemsize
    w_bytes = xin_bytes
    out_bytes = jnp.dtype(orig_dtype).itemsize

    sub = 8 if xin_bytes >= 4 else 16
    rows_pad = _round_up(rows, sub)          # sublane only; NOT rounded to tm

    # ---- VMEM-budget-driven tile sizes -------------------------------------
    phys_vmem = _phys_vmem_bytes()
    budget = int(phys_vmem * 0.8) - 4 * _MIB  # headroom for Mosaic scratch

    # Hidden tile: largest lane multiple dividing n_pad whose (double-buffered)
    # W1/W2 blocks use <= half the budget.  th == n_pad => weights resident,
    # fetched once; th < n_pad => weights streamed per hidden chunk.
    th_cap = min(n_pad, 2048)
    th_by_budget = (budget // 2) // max(1, 4 * n_pad * w_bytes)
    th = max(_LANE, min(th_cap, (th_by_budget // _LANE) * _LANE))
    while n_pad % th:                        # must divide n_pad exactly (no
        th -= _LANE                          # garbage hidden cols in the sum)

    # Row tile: fit x/out double-buffers, f32 accumulator and f32 hidden temp
    # in the remaining budget; cap at 256 (MXU tile) and ensure >=4 row tiles
    # for large inputs so "parallel" can shard across TensorCores (megacore).
    weight_block_bytes = 2 * (n_pad * th + th * n_pad) * w_bytes
    bias_block_bytes = 2 * (th + n_pad) * 4
    per_row = n_pad * (2 * xin_bytes + 2 * out_bytes + 4) + th * 4
    tm_by_budget = (budget - weight_block_bytes - bias_block_bytes) // max(1, per_row)
    tm = min(256, max(0, (tm_by_budget // sub) * sub))
    tm = max(sub, min(tm, _round_up(_cdiv(rows_pad, 4), sub)))
    # TODO(synk): for extreme n_dim where even a (tm, n_pad) accumulator cannot
    # fit, a third grid axis tiling output columns would be needed.

    grid = (_cdiv(rows_pad, tm), n_pad // th)

    # ---- Pad / cast the activation (single pass; no-op if already aligned) --
    dn = n_pad - n_dim
    dr = rows_pad - rows
    x2d = x2d.astype(mxu_dtype)
    if dn or dr:
        x2d = jnp.pad(x2d, ((0, dr), (0, dn)))

    # ---- Cost estimate & VMEM limit (with explicit 2x double-buffer factor) -
    weight_passes = 1 if th == n_pad else grid[0]
    flops = 4 * rows_pad * n_pad * n_pad                      # 2 matmuls
    bytes_accessed = (rows_pad * n_pad * (xin_bytes + out_bytes)
                      + weight_passes * 2 * n_pad * n_pad * w_bytes
                      + 2 * n_pad * 4)
    vmem_needed = (weight_block_bytes + bias_block_bytes
                   + 2 * tm * n_pad * xin_bytes               # x tiles
                   + 2 * tm * n_pad * out_bytes               # out tiles
                   + tm * n_pad * 4                           # f32 accumulator
                   + tm * th * 4)                             # f32 hidden temp
    vmem_limit = int(min(phys_vmem - 4 * _MIB,
                         max(vmem_needed * 1.4 + 2 * _MIB, 32 * _MIB)))

    out = pl.pallas_call(
        _ffn_kernel,
        out_shape=jax.ShapeDtypeStruct((rows_pad, n_pad), orig_dtype),
        grid_spec=pltpu.PrefetchScalarGridSpec(
            num_scalar_prefetch=0,
            grid=grid,
            in_specs=[
                pl.BlockSpec((tm, n_pad), lambda i, j: (i, 0)),   # x row tile
                pl.BlockSpec((n_pad, th), lambda i, j: (0, j)),   # W1 hidden chunk
                pl.BlockSpec((1, th), lambda i, j: (0, j)),       # b1 chunk
                pl.BlockSpec((th, n_pad), lambda i, j: (j, 0)),   # W2 hidden chunk
                pl.BlockSpec((1, n_pad), lambda i, j: (0, 0)),    # b2 (resident)
            ],
            out_specs=pl.BlockSpec((tm, n_pad), lambda i, j: (i, 0)),
            scratch_shapes=[pltpu.VMEM((tm, n_pad), jnp.float32)],
        ),
        compiler_params=pltpu.CompilerParams(
            dimension_semantics=("parallel", "arbitrary"),
            vmem_limit_bytes=vmem_limit),
        cost_estimate=pl.CostEstimate(
            flops=int(flops), transcendentals=0,
            bytes_accessed=int(bytes_accessed)),
    )(x2d, w1p, b1p, w2p, b2p)

    if dn or dr:
        out = out[:rows, :n_dim]
    return out.reshape(orig_shape)


def init_params(key, n_dim, dtype=jnp.float32):
    """Deterministic init matching nn.Linear's U(-1/sqrt(in), 1/sqrt(in))."""
    k1, k2, k3, k4 = jax.random.split(key, 4)
    bound = 1.0 / (n_dim ** 0.5)
    # PyTorch stores Linear weight as (out, in); we pre-transpose to (in, out).
    w1 = jax.random.uniform(k1, (n_dim, n_dim), dtype, -bound, bound).T
    b1 = jax.random.uniform(k2, (n_dim,), dtype, -bound, bound)
    w2 = jax.random.uniform(k3, (n_dim, n_dim), dtype, -bound, bound).T
    b2 = jax.random.uniform(k4, (n_dim,), dtype, -bound, bound)
    return w1, b1, w2, b2


if __name__ == "__main__":
    key = jax.random.PRNGKey(0)
    kx, kp = jax.random.split(key)

    batch, seq, n_dim = 2, 8, 32
    x = jax.random.normal(kx, (batch, seq, n_dim), dtype=jnp.float32)
    w1, b1, w2, b2 = init_params(kp, n_dim)

    # Pad/cast weights once, outside the per-call hot path (bf16 MXU feed).
    params = prepare_ffn_params(w1, b1, w2, b2, mxu_dtype=jnp.bfloat16)

    y = classic_ffn_block(x, *params)
    y = jax.block_until_ready(y)
    assert y.shape == x.shape and y.dtype == x.dtype

    # Reference 1: same mixed-precision math (bf16 MXU inputs, f32 accumulate).
    xb = x.reshape(-1, n_dim).astype(jnp.bfloat16)
    w1b = w1.astype(jnp.bfloat16)
    w2b = w2.astype(jnp.bfloat16)
    h_mp = jnp.maximum(
        jnp.dot(xb, w1b, preferred_element_type=jnp.float32) + b1, 0.0)
    y_mp = (jnp.dot(h_mp.astype(jnp.bfloat16), w2b,
                    preferred_element_type=jnp.float32) + b2).reshape(x.shape)
    assert jnp.allclose(y, y_mp, atol=1e-4, rtol=1e-4)

    # Reference 2: pure-f32 PyTorch-equivalent math (loose: bf16 MXU feed).
    h_f32 = jnp.maximum(x.reshape(-1, n_dim) @ w1 + b1, 0.0)
    y_f32 = (h_f32 @ w2 + b2).reshape(x.shape)
    assert jnp.allclose(y, y_f32, atol=1e-1, rtol=1e-1)

    print("KERNEL_OK")
</pallas_src>

<mosaic_0001>
module attributes {stable_mosaic.version = 11 : i64} {
  func.func @_ffn_kernel(%arg0: i32, %arg1: i32, %arg2: memref<16x128xbf16, #tpu.memory_space<vmem>>, %arg3: memref<128x128xbf16, #tpu.memory_space<vmem>>, %arg4: memref<1x128xf32, #tpu.memory_space<vmem>>, %arg5: memref<128x128xbf16, #tpu.memory_space<vmem>>, %arg6: memref<1x128xf32, #tpu.memory_space<vmem>>, %arg7: memref<16x128xf32, #tpu.memory_space<vmem>>, %arg8: memref<16x128xf32, #tpu.memory_space<vmem>>) attributes {dimension_semantics = [#tpu.dimension_semantics<parallel>, #tpu.dimension_semantics<arbitrary>], iteration_bounds = array<i64: 1, 1>, scalar_prefetch = 0 : i64, scratch_operands = 1 : i64, tpu.core_type = #tpu.core_type<tc>, window_params = [{transform_indices = @transform_0, window_bounds = array<i64: 16, 128>}, {transform_indices = @transform_1, window_bounds = array<i64: 128, 128>}, {transform_indices = @transform_2, window_bounds = array<i64: 1, 128>}, {transform_indices = @transform_3, window_bounds = array<i64: 128, 128>}, {pipeline_mode = #tpu.pipeline_mode<synchronous>, transform_indices = @transform_4, window_bounds = array<i64: 1, 128>}, {transform_indices = @transform_5, window_bounds = array<i64: 16, 128>}]} {
    %c0_i32 = arith.constant 0 : i32
    %0 = arith.cmpi eq, %arg1, %c0_i32 : i32
    %1 = arith.extui %0 : i1 to i32
    %c0_i32_0 = arith.constant 0 : i32
    %2 = arith.cmpi ne, %1, %c0_i32_0 : i32
    scf.if %2 {
      %cst_16 = arith.constant 0.000000e+00 : f32
      %20 = vector.broadcast %cst_16 : f32 to vector<16x128xf32>
      %c0_17 = arith.constant 0 : index
      %c0_18 = arith.constant 0 : index
      %21 = vector.load %arg8[%c0_17, %c0_18] : memref<16x128xf32, #tpu.memory_space<vmem>>, vector<16x128xf32>
      tpu.vector_store %arg8[%c0_17, %c0_18], %20 {strides = array<i32>} : memref<16x128xf32, #tpu.memory_space<vmem>>, vector<16x128xf32>,
    } else {
    }
    %c0 = arith.constant 0 : index
    %c0_1 = arith.constant 0 : index
    %3 = vector.load %arg2[%c0, %c0_1] : memref<16x128xbf16, #tpu.memory_space<vmem>>, vector<16x128xbf16>
    %c0_2 = arith.constant 0 : index
    %c0_3 = arith.constant 0 : index
    %4 = vector.load %arg3[%c0_2, %c0_3] : memref<128x128xbf16, #tpu.memory_space<vmem>>, vector<128x128xbf16>
    %cst = arith.constant dense<0.000000e+00> : vector<16x128xf32>
    %5 = tpu.matmul %3, %4, %cst {dimension_numbers = #tpu.dot_dimension_numbers<[1], [0], [0], [1], [0, 0, 1, 1], [], []>} : vector<16x128xbf16>, vector<128x128xbf16>, vector<16x128xf32> -> vector<16x128xf32>
    %c0_4 = arith.constant 0 : index
    %c0_5 = arith.constant 0 : index
    %6 = vector.load %arg4[%c0_4, %c0_5] : memref<1x128xf32, #tpu.memory_space<vmem>>, vector<1x128xf32>
    %7 = vector.broadcast %6 : vector<1x128xf32> to vector<16x128xf32>
    %8 = arith.addf %5, %7 : vector<16x128xf32>
    %cst_6 = arith.constant 0.000000e+00 : f32
    %9 = vector.broadcast %cst_6 : f32 to vector<16x128xf32>
    %10 = arith.maximumf %8, %9 : vector<16x128xf32>
    %c0_7 = arith.constant 0 : index
    %c0_8 = arith.constant 0 : index
    %11 = vector.load %arg8[%c0_7, %c0_8] : memref<16x128xf32, #tpu.memory_space<vmem>>, vector<16x128xf32>
    %12 = arith.truncf %10 : vector<16x128xf32> to vector<16x128xbf16>
    %c0_9 = arith.constant 0 : index
    %c0_10 = arith.constant 0 : index
    %13 = vector.load %arg5[%c0_9, %c0_10] : memref<128x128xbf16, #tpu.memory_space<vmem>>, vector<128x128xbf16>
    %cst_11 = arith.constant dense<0.000000e+00> : vector<16x128xf32>
    %14 = tpu.matmul %12, %13, %cst_11 {dimension_numbers = #tpu.dot_dimension_numbers<[1], [0], [0], [1], [0, 0, 1, 1], [], []>} : vector<16x128xbf16>, vector<128x128xbf16>, vector<16x128xf32> -> vector<16x128xf32>
    %15 = arith.addf %11, %14 : vector<16x128xf32>
    %c0_12 = arith.constant 0 : index
    %c0_13 = arith.constant 0 : index
    %16 = vector.load %arg8[%c0_12, %c0_13] : memref<16x128xf32, #tpu.memory_space<vmem>>, vector<16x128xf32>
    tpu.vector_store %arg8[%c0_12, %c0_13], %15 {strides = array<i32>} : memref<16x128xf32, #tpu.memory_space<vmem>>, vector<16x128xf32>,
    %c0_i32_14 = arith.constant 0 : i32
    %17 = arith.cmpi eq, %arg1, %c0_i32_14 : i32
    %18 = arith.extui %17 : i1 to i32
    %c0_i32_15 = arith.constant 0 : i32
    %19 = arith.cmpi ne, %18, %c0_i32_15 : i32
    scf.if %19 {
      %c0_16 = arith.constant 0 : index
      %c0_17 = arith.constant 0 : index
      %20 = vector.load %arg8[%c0_16, %c0_17] : memref<16x128xf32, #tpu.memory_space<vmem>>, vector<16x128xf32>
      %c0_18 = arith.constant 0 : index
      %c0_19 = arith.constant 0 : index
      %21 = vector.load %arg6[%c0_18, %c0_19] : memref<1x128xf32, #tpu.memory_space<vmem>>, vector<1x128xf32>
      %22 = vector.broadcast %21 : vector<1x128xf32> to vector<16x128xf32>
      %23 = arith.addf %20, %22 : vector<16x128xf32>
      %c0_20 = arith.constant 0 : index
      %c0_21 = arith.constant 0 : index
      %24 = vector.load %arg7[%c0_20, %c0_21] : memref<16x128xf32, #tpu.memory_space<vmem>>, vector<16x128xf32>
      tpu.vector_store %arg7[%c0_20, %c0_21], %23 {strides = array<i32>} : memref<16x128xf32, #tpu.memory_space<vmem>>, vector<16x128xf32>,
    } else {
    }
    return
  }
  func.func @transform_0(%arg0: i32, %arg1: i32) -> (i32, i32) {
    %c0_i32 = arith.constant 0 : i32
    %c0_i32_0 = arith.constant 0 : i32
    return %arg0, %c0_i32 : i32, i32
  }
  func.func @transform_1(%arg0: i32, %arg1: i32) -> (i32, i32) {
    %c0_i32 = arith.constant 0 : i32
    %c0_i32_0 = arith.constant 0 : i32
    return %c0_i32, %arg1 : i32, i32
  }
  func.func @transform_2(%arg0: i32, %arg1: i32) -> (i32, i32) {
    %c0_i32 = arith.constant 0 : i32
    %c0_i32_0 = arith.constant 0 : i32
    return %c0_i32, %arg1 : i32, i32
  }
  func.func @transform_3(%arg0: i32, %arg1: i32) -> (i32, i32) {
    %c0_i32 = arith.constant 0 : i32
    %c0_i32_0 = arith.constant 0 : i32
    return %arg1, %c0_i32 : i32, i32
  }
  func.func @transform_4(%arg0: i32, %arg1: i32) -> (i32, i32) {
    %c0_i32 = arith.constant 0 : i32
    %c0_i32_0 = arith.constant 0 : i32
    %c0_i32_1 = arith.constant 0 : i32
    return %c0_i32, %c0_i32_0 : i32, i32
  }
  func.func @transform_5(%arg0: i32, %arg1: i32) -> (i32, i32) {
    %c0_i32 = arith.constant 0 : i32
    %c0_i32_0 = arith.constant 0 : i32
    return %arg0, %c0_i32 : i32, i32
  }
}

</mosaic_0001>

<llo_original>
// kernel: classic_ffn_block.1
$region0: #{classic_ffn_block.1}
  #allocation0 [shape = 'u32[]', space=smem, size = 0x4, offset = 0x4, fixed_abs, tag = 'smem constant byte address 0x4 - core index']
  #allocation1 [shape = 'u32[144,128]{1,0:T(1,128)}', space=vmem, size = 0x12000, scoped, tag = 'internal scratch']
  #allocation2 [shape = 'f32[16,128]{1,0:T(8,128)}', space=vmem, size = 0x2000, scoped, tag = 'scratch operand']
  %s0 = inlined_call_operand.vmem [shape: bf16[16,128], index: 0, kind: input, shape index: {}]
  %s1 = inlined_call_operand.hbm [shape: bf16[128,128], index: 1, kind: input, shape index: {}]
  %s2 = inlined_call_operand.vmem [shape: f32[1,128], index: 2, kind: input, shape index: {}]
  %s3 = inlined_call_operand.hbm [shape: bf16[128,128], index: 3, kind: input, shape index: {}]
  %s4 = inlined_call_operand.vmem [shape: f32[1,128], index: 4, kind: input, shape index: {}]
  %s5 = inlined_call_operand.vmem [shape: f32[16,128], index: 5, kind: output, shape index: {}]
  %s6 = sld [smem:[#allocation0]]
  $region46: #{classic_ffn_block.1} parent=0
    _
  %s8 = ssub.s32 1, %s6
  %s9 = scalar_select 0, %s8, %s6
  $region1: #{classic_ffn_block.1} parent=0
    #allocation3 [shape = 'u8[32768]{0}', space=vmem, size = 0x8000, scoped, tag = 'input window, operand 1, single buffered']
    #allocation4 [shape = 's32[1]{0}', space=sflag, size = 0x4, scoped, tag = 'scoped memory for classic_ffn_block.1']
    #allocation5 [shape = 'u8[32768]{0}', space=vmem, size = 0x8000, scoped, tag = 'input window, operand 3, single buffered']
    #allocation6 [shape = 's32[1]{0}', space=sflag, size = 0x4, scoped, tag = 'scoped memory for classic_ffn_block.1']
    %10 = vsyncpa [#allocation4], 0
    %11 = vsyncpa [#allocation6], 0
    // Predicated region
    $region2: #{classic_ffn_block.1} parent=1 // pred_check
      _
    $region3: #{classic_ffn_block.1} parent=1 // pred_check_branch
      %13 = sbr.rel (0) target = $region5
    $region4: #{classic_ffn_block.1} parent=1 // pred_region
      _
    $region5: #{classic_ffn_block.1} parent=1 // pred_fallthru
      _
    // Predicated region
    $region6: #{classic_ffn_block.1} parent=1 // pred_check
      _
    $region7: #{classic_ffn_block.1} parent=1 // pred_check_branch
      %15 = sbr.rel (0) target = $region9
    $region8: #{classic_ffn_block.1} parent=1 // pred_region
      %s17 = ssub.s32 1024, 1024
      %18 = vsyncadd [#allocation4], %s17
      %s19 = sshll.u32 [#allocation3], 4
      %s20 = int_to_ptr.vmem [resolvable:$true] %s19
      %25 = dma.hbm_to_vmem [thread:$0]  %s1, 1024, %s20, [#allocation4], 64, 64, 4
    $region9: #{classic_ffn_block.1} parent=1 // pred_fallthru
      _
    // Predicated region
    $region10: #{classic_ffn_block.1} parent=1 // pred_check
      _
    $region11: #{classic_ffn_block.1} parent=1 // pred_check_branch
      %27 = sbr.rel (0) target = $region13
    $region12: #{classic_ffn_block.1} parent=1 // pred_region
      _
    $region13: #{classic_ffn_block.1} parent=1 // pred_fallthru
      _
    // Predicated region
    $region14: #{classic_ffn_block.1} parent=1 // pred_check
      _
    $region15: #{classic_ffn_block.1} parent=1 // pred_check_branch
      %29 = sbr.rel (0) target = $region17
    $region16: #{classic_ffn_block.1} parent=1 // pred_region
      %s31 = ssub.s32 1024, 1024
      %32 = vsyncadd [#allocation6], %s31
      %s33 = sshll.u32 [#allocation5], 4
      %s34 = int_to_ptr.vmem [resolvable:$true] %s33
      %39 = dma.hbm_to_vmem [thread:$0]  %s3, 1024, %s34, [#allocation6], 64, 64, 4
    $region17: #{classic_ffn_block.1} parent=1 // pred_fallthru
      _
    // Predicated region
    $region18: #{classic_ffn_block.1} parent=1 // pred_check
      _
    $region19: #{classic_ffn_block.1} parent=1 // pred_check_branch
      %41 = sbr.rel (0) target = $region21
    $region20: #{classic_ffn_block.1} parent=1 // pred_region
      _
    $region21: #{classic_ffn_block.1} parent=1 // pred_fallthru
      _
    // Predicated region
    $region22: #{classic_ffn_block.1} parent=1 // pred_check
      _
    $region23: #{classic_ffn_block.1} parent=1 // pred_check_branch
      %43 = sbr.rel (0) target = $region25
    $region24: #{classic_ffn_block.1} parent=1 // pred_region
      %44 = dma.done [#allocation4], 1024
    $region25: #{classic_ffn_block.1} parent=1 // pred_fallthru
      _
    // Predicated region
    $region26: #{classic_ffn_block.1} parent=1 // pred_check
      _
    $region27: #{classic_ffn_block.1} parent=1 // pred_check_branch
      %46 = sbr.rel (0) target = $region29
    $region28: #{classic_ffn_block.1} parent=1 // pred_region
      %47 = dma.done [#allocation6], 1024
    $region29: #{classic_ffn_block.1} parent=1 // pred_fallthru
      _
    %p49 = scmp.eq.s32.totalorder 0, 0
    // Predicated region
    $region30: #{classic_ffn_block.1} parent=1 // pred_check
      %p50 = pneg %p49
    $region31: #{classic_ffn_block.1} parent=1 // pred_check_branch
      %52 = sbr.rel (%p50) target = $region33
    $region32: #{classic_ffn_block.1} parent=1 // pred_region
      %53 = vst [vmem:[#allocation2] sm:$0xff] 0.0
      %54 = vst [vmem:[#allocation2 + $0x8] sm:$0xff] 0.0
    $region33: #{classic_ffn_block.1} parent=1 // pred_fallthru
      _
    %v55 = vld [vmem:[%s0] sm:$0xf]
    %v56 = vld [vmem:[%s0 + $0x4] sm:$0xf]
    %v57 = vld [vmem:[#allocation3] sm:$0xf]
    %v58 = vld [vmem:[#allocation3 + $0x4] sm:$0xf]
    %v59 = vld [vmem:[#allocation3 + $0x8] sm:$0xf]
    %v60 = vld [vmem:[#allocation3 + $0xc] sm:$0xf]
    %v61 = vld [vmem:[#allocation3 + $0x10] sm:$0xf]
    %v62 = vld [vmem:[#allocation3 + $0x14] sm:$0xf]
    %v63 = vld [vmem:[#allocation3 + $0x18] sm:$0xf]
    %v64 = vld [vmem:[#allocation3 + $0x1c] sm:$0xf]
    %v65 = vld [vmem:[#allocation3 + $0x20] sm:$0xf]
    %v66 = vld [vmem:[#allocation3 + $0x24] sm:$0xf]
    %v67 = vld [vmem:[#allocation3 + $0x28] sm:$0xf]
    %v68 = vld [vmem:[#allocation3 + $0x2c] sm:$0xf]
    %v69 = vld [vmem:[#allocation3 + $0x30] sm:$0xf]
    %v70 = vld [vmem:[#allocation3 + $0x34] sm:$0xf]
    %v71 = vld [vmem:[#allocation3 + $0x38] sm:$0xf]
    %v72 = vld [vmem:[#allocation3 + $0x3c] sm:$0xf]
    %v73 = vld [vmem:[%s2] sm:$0x1]
    %v75 = vlaneseq
    %v76 = vshrl.u32 %v75, 7
    %v77 = vsub.s32 0, %v76
    %v78 = vrot.slane %v73, %v77
    %v82 = vunpack.c.l.b16 %v55
    %v83 = vunpack.c.l.b16 %v56
    %v84 = vpack.c.b16 %v83, %v82
    %v102 = vunpack.c.l.b16 %v57
    %v103 = vunpack.c.l.b16 %v58
    %v104 = vunpack.c.l.b16 %v59
    %v105 = vunpack.c.l.b16 %v60
    %v106 = vunpack.c.l.b16 %v61
    %v107 = vunpack.c.l.b16 %v62
    %v108 = vunpack.c.l.b16 %v63
    %v109 = vunpack.c.l.b16 %v64
    %v110 = vunpack.c.l.b16 %v65
    %v111 = vunpack.c.l.b16 %v66
    %v112 = vunpack.c.l.b16 %v67
    %v113 = vunpack.c.l.b16 %v68
    %v114 = vunpack.c.l.b16 %v69
    %v115 = vunpack.c.l.b16 %v70
    %v116 = vunpack.c.l.b16 %v71
    %v117 = vunpack.c.l.b16 %v72
    %v118 = vpack.c.b16 %v103, %v102
    %v119 = vpack.c.b16 %v105, %v104
    %v120 = vpack.c.b16 %v107, %v106
    %v121 = vpack.c.b16 %v109, %v108
    %v122 = vpack.c.b16 %v111, %v110
    %v123 = vpack.c.b16 %v113, %v112
    %v124 = vpack.c.b16 %v115, %v114
    %v125 = vpack.c.b16 %v117, %v116
    %134 = vmatprep.subr.bf16.mxu0 0
    %135 = vmatpush1.bf16.msra.mxu0 %v125
    %136 = vmatprep.subr.bf16.mxu0 0
    %137 = vmatpush1.bf16.msra.mxu0 %v124
    %138 = vmatprep.subr.bf16.mxu0 0
    %139 = vmatpush1.bf16.msra.mxu0 %v123
    %140 = vmatprep.subr.bf16.mxu0 0
    %141 = vmatpush1.bf16.msra.mxu0 %v122
    %142 = vmatprep.subr.bf16.mxu0 0
    %143 = vmatpush1.bf16.msra.mxu0 %v121
    %144 = vmatprep.subr.bf16.mxu0 0
    %145 = vmatpush1.bf16.msra.mxu0 %v120
    %146 = vmatprep.subr.bf16.mxu0 0
    %147 = vmatpush1.bf16.msra.mxu0 %v119
    %148 = vmatprep.subr.bf16.mxu0 0
    %149 = vmatpush1.bf16.msra.mxu0 %v118
    %150 = vmatprep.subr.bf16.mxu0 0
    %151 = vmatpush2.bf16.msra.mxu0 0
    %152 = vmatprep.subr.bf16.mxu0 0
    %153 = vmatpush2.bf16.msra.mxu0 0
    %154 = vmatprep.subr.bf16.mxu0 0
    %155 = vmatpush2.bf16.msra.mxu0 0
    %156 = vmatprep.subr.bf16.mxu0 0
    %157 = vmatpush2.bf16.msra.mxu0 0
    %158 = vmatprep.subr.bf16.mxu0 0
    %159 = vmatpush2.bf16.msra.mxu0 0
    %160 = vmatprep.subr.bf16.mxu0 0
    %161 = vmatpush2.bf16.msra.mxu0 0
    %162 = vmatprep.subr.bf16.mxu0 0
    %163 = vmatpush2.bf16.msra.mxu0 0
    %164 = vmatprep.subr.bf16.mxu0 0
    %165 = vmatpush2.bf16.msra.mxu0 0
    %166 = vmatprep.mubr.bf16.mxu0 0
    %167 = vmatmul.mubr.bf16.gmra.mxu0 %v84
    %v168 = vpop.f32.mrf.mxu0
    %v169 = vadd.f32 %v78, %v168
    %v170 = vpop.f32.mrf.mxu0
    %v171 = vpop.f32.mrf.mxu0
    %v172 = vadd.f32 %v78, %v171
    %v173 = vpop.f32.mrf.mxu0
    %174 = vdwg.mxu0
    %v175 = vmax.f32 %v169, 0.0
    %v176 = vmax.f32 %v172, 0.0
    %v177 = vld [vmem:[#allocation2] sm:$0xff]
    %v178 = vld [vmem:[#allocation2 + $0x8] sm:$0xff]
    %v179 = vpack.c.bf16 %v176, %v175
    %v180 = vld [vmem:[#allocation5] sm:$0xf]
    %v181 = vld [vmem:[#allocation5 + $0x4] sm:$0xf]
    %v182 = vld [vmem:[#allocation5 + $0x8] sm:$0xf]
    %v183 = vld [vmem:[#allocation5 + $0xc] sm:$0xf]
    %v184 = vld [vmem:[#allocation5 + $0x10] sm:$0xf]
    %v185 = vld [vmem:[#allocation5 + $0x14] sm:$0xf]
    %v186 = vld [vmem:[#allocation5 + $0x18] sm:$0xf]
    %v187 = vld [vmem:[#allocation5 + $0x1c] sm:$0xf]
    %v188 = vld [vmem:[#allocation5 + $0x20] sm:$0xf]
    %v189 = vld [vmem:[#allocation5 + $0x24] sm:$0xf]
    %v190 = vld [vmem:[#allocation5 + $0x28] sm:$0xf]
    %v191 = vld [vmem:[#allocation5 + $0x2c] sm:$0xf]
    %v192 = vld [vmem:[#allocation5 + $0x30] sm:$0xf]
    %v193 = vld [vmem:[#allocation5 + $0x34] sm:$0xf]
    %v194 = vld [vmem:[#allocation5 + $0x38] sm:$0xf]
    %v195 = vld [vmem:[#allocation5 + $0x3c] sm:$0xf]
    %v212 = vunpack.c.l.b16 %v180
    %v213 = vunpack.c.l.b16 %v181
    %v214 = vunpack.c.l.b16 %v182
    %v215 = vunpack.c.l.b16 %v183
    %v216 = vunpack.c.l.b16 %v184
    %v217 = vunpack.c.l.b16 %v185
    %v218 = vunpack.c.l.b16 %v186
    %v219 = vunpack.c.l.b16 %v187
    %v220 = vunpack.c.l.b16 %v188
    %v221 = vunpack.c.l.b16 %v189
    %v222 = vunpack.c.l.b16 %v190
    %v223 = vunpack.c.l.b16 %v191
    %v224 = vunpack.c.l.b16 %v192
    %v225 = vunpack.c.l.b16 %v193
    %v226 = vunpack.c.l.b16 %v194
    %v227 = vunpack.c.l.b16 %v195
    %v228 = vpack.c.b16 %v213, %v212
    %v229 = vpack.c.b16 %v215, %v214
    %v230 = vpack.c.b16 %v217, %v216
    %v231 = vpack.c.b16 %v219, %v218
    %v232 = vpack.c.b16 %v221, %v220
    %v233 = vpack.c.b16 %v223, %v222
    %v234 = vpack.c.b16 %v225, %v224
    %v235 = vpack.c.b16 %v227, %v226
    %244 = vmatprep.subr.bf16.mxu0 0
    %245 = vmatpush1.bf16.msra.mxu0 %v235
    %246 = vmatprep.subr.bf16.mxu0 0
    %247 = vmatpush1.bf16.msra.mxu0 %v234
    %248 = vmatprep.subr.bf16.mxu0 0
    %249 = vmatpush1.bf16.msra.mxu0 %v233
    %250 = vmatprep.subr.bf16.mxu0 0
    %251 = vmatpush1.bf16.msra.mxu0 %v232
    %252 = vmatprep.subr.bf16.mxu0 0
    %253 = vmatpush1.bf16.msra.mxu0 %v231
    %254 = vmatprep.subr.bf16.mxu0 0
    %255 = vmatpush1.bf16.msra.mxu0 %v230
    %256 = vmatprep.subr.bf16.mxu0 0
    %257 = vmatpush1.bf16.msra.mxu0 %v229
    %258 = vmatprep.subr.bf16.mxu0 0
    %259 = vmatpush1.bf16.msra.mxu0 %v228
    %260 = vmatprep.subr.bf16.mxu0 0
    %261 = vmatpush2.bf16.msra.mxu0 0
    %262 = vmatprep.subr.bf16.mxu0 0
    %263 = vmatpush2.bf16.msra.mxu0 0
    %264 = vmatprep.subr.bf16.mxu0 0
    %265 = vmatpush2.bf16.msra.mxu0 0
    %266 = vmatprep.subr.bf16.mxu0 0
    %267 = vmatpush2.bf16.msra.mxu0 0
    %268 = vmatprep.subr.bf16.mxu0 0
    %269 = vmatpush2.bf16.msra.mxu0 0
    %270 = vmatprep.subr.bf16.mxu0 0
    %271 = vmatpush2.bf16.msra.mxu0 0
    %272 = vmatprep.subr.bf16.mxu0 0
    %273 = vmatpush2.bf16.msra.mxu0 0
    %274 = vmatprep.subr.bf16.mxu0 0
    %275 = vmatpush2.bf16.msra.mxu0 0
    %276 = vmatprep.mubr.bf16.mxu0 0
    %277 = vmatmul.mubr.bf16.gmra.mxu0 %v179
    %v278 = vpop.f32.mrf.mxu0
    %v279 = vadd.f32 0.0, %v278
    %v280 = vpop.f32.mrf.mxu0
    %v281 = vpop.f32.mrf.mxu0
    %v282 = vadd.f32 0.0, %v281
    %v283 = vpop.f32.mrf.mxu0
    %284 = vdwg.mxu0
    %v285 = vadd.f32 %v177, %v279
    %v286 = vadd.f32 %v178, %v282
    %287 = vst [vmem:[#allocation2] sm:$0xff] %v285
    %288 = vst [vmem:[#allocation2 + $0x8] sm:$0xff] %v286
    // Predicated region
    $region34: #{classic_ffn_block.1} parent=1 // pred_check
      %p289 = pneg %p49
    $region35: #{classic_ffn_block.1} parent=1 // pred_check_branch
      %291 = sbr.rel (%p289) target = $region37
    $region36: #{classic_ffn_block.1} parent=1 // pred_region
      %v292 = vld [vmem:[#allocation2] sm:$0xff]
      %v293 = vld [vmem:[#allocation2 + $0x8] sm:$0xff]
      %v294 = vld [vmem:[%s4] sm:$0x1]
      %v296 = vlaneseq
      %v297 = vshrl.u32 %v296, 7
      %v298 = vsub.s32 0, %v297
      %v299 = vrot.slane %v294, %v298
      %v301 = vadd.f32 %v292, %v299
      %v302 = vadd.f32 %v293, %v299
      %303 = vst [vmem:[%s5] sm:$0xff] %v301
      %304 = vst [vmem:[%s5 + $0x8] sm:$0xff] %v302
    $region37: #{classic_ffn_block.1} parent=1 // pred_fallthru
      _
    // Predicated region
    $region38: #{classic_ffn_block.1} parent=1 // pred_check
      _
    $region39: #{classic_ffn_block.1} parent=1 // pred_check_branch
      %306 = sbr.rel (0) target = $region41
    $region40: #{classic_ffn_block.1} parent=1 // pred_region
      _
    $region41: #{classic_ffn_block.1} parent=1 // pred_fallthru
      _
    // Predicated region
    $region42: #{classic_ffn_block.1} parent=1 // pred_check
      _
    $region43: #{classic_ffn_block.1} parent=1 // pred_check_branch
      %308 = sbr.rel (0) target = $region45
    $region44: #{classic_ffn_block.1} parent=1 // pred_region
      _
    $region45: #{classic_ffn_block.1} parent=1 // pred_fallthru
      _
    %309 = vsyncpa [#allocation4], 1
    %310 = vsyncpa [#allocation6], 1

</llo_original>
